<compile_context>
chip_gen: v5e
topology: v5e:2x2
jax: 0.10.0
libtpu: 0.0.40
codegen_flags: <defaults>
</compile_context>

<pallas_src>
import functools

import numpy as np
import jax
import jax.numpy as jnp
from jax.experimental import pallas as pl
from jax.experimental.pallas import tpu as pltpu

DEEP_RETRIEVAL_TYPES = ['v-attention', 'attention_bsim',
                        'attention_bsim_bval', 'attention_bsim_nval']

_NEG_BIG = -1e30          # "minus infinity" that keeps exp() NaN-free


# ------------------------------ helpers -------------------------------------

def _full_spec(shape):
    """Whole-array block; index_map ignores the grid indices."""
    n = len(shape)
    return pl.BlockSpec(shape, lambda *_: (0,) * n)


def _default_vmem_limit():
    """Generation-aware VMEM limit (~80% of physical, clamped)."""
    phys = 64 * 1024 * 1024          # conservative fallback (v7x has 64 MiB/TC)
    try:
        info = pltpu.get_tpu_info()
        cap = getattr(info, "vmem_capacity_bytes", None)
        if cap:
            phys = int(cap)
    except Exception:
        pass
    return max(32 * 1024 * 1024, min(int(phys * 0.8), phys - 8 * 1024 * 1024))


# ----------------------------- Pallas kernels -------------------------------

def _softmax_tile_update(sim, p, j, n_valid, tile, tpp, needs_mask, sim_dtype,
                         sim_ref, m_sc, l_sc):
    """Flash-style running max / denominator for one candidate tile."""
    if jnp.dtype(sim_dtype) != jnp.dtype(jnp.float32):
        # Round once so the stored logits and the m/l stats are consistent:
        # the finalized probabilities exp(sim_stored - m)/l stay in [0, 1].
        sim = sim.astype(sim_dtype).astype(jnp.float32)
    if needs_mask:        # static: only when the last real tile is partial
        col = (p * tpp + j) * tile + jax.lax.broadcasted_iota(jnp.int32, sim.shape, 1)
        sim = jnp.where(col < n_valid, sim, _NEG_BIG)

    sim_ref[...] = sim.astype(sim_dtype)

    m_prev = m_sc[...]
    m_new = jnp.maximum(m_prev, jnp.max(sim, axis=1, keepdims=True))
    l_sc[...] = (jnp.exp(m_prev - m_new) * l_sc[...]
                 + jnp.sum(jnp.exp(sim - m_new), axis=1, keepdims=True))
    m_sc[...] = m_new


def _vattn_stats_kernel(cdt, scale, n_valid, tile, tpp, n_tiles, has_dummy,
                        needs_mask, sim_dtype,
                        qp_ref, c_ref, wk_ref, bk_ref,
                        sim_ref, m_ref, l_ref, m_sc, l_sc):
    p = pl.program_id(0)
    j = pl.program_id(1)

    @pl.when(j == 0)
    def _init():
        m_sc[...] = jnp.full_like(m_sc, _NEG_BIG)
        l_sc[...] = jnp.zeros_like(l_sc)

    def _compute():
        c = c_ref[...].astype(cdt)                    # f32 HBM tile -> bf16 (fused cast)
        kc = jnp.dot(c, wk_ref[...], preferred_element_type=jnp.float32) + bk_ref[...]
        kc_b = kc.astype(cdt)
        # similarity = (K(cand) @ Q(query)^T)^T computed directly as [B, TILE]
        sim = jax.lax.dot_general(qp_ref[...], kc_b, (((1,), (1,)), ((), ())),
                                  preferred_element_type=jnp.float32) * scale
        _softmax_tile_update(sim, p, j, n_valid, tile, tpp, needs_mask, sim_dtype,
                             sim_ref, m_sc, l_sc)

    if has_dummy:                                     # skip grid-rounding tiles
        pl.when(p * tpp + j < n_tiles)(_compute)
    else:
        _compute()

    @pl.when(j == pl.num_programs(1) - 1)
    def _finalize():
        m_ref[0] = m_sc[...]
        l_ref[0] = l_sc[...]


def _bsim_stats_kernel(cdt, scale, n_valid, tile, tpp, n_tiles, has_dummy,
                       needs_mask, sim_dtype,
                       kq_ref, nq_ref, c_ref, wk_ref, bk_ref,
                       sim_ref, m_ref, l_ref, m_sc, l_sc):
    p = pl.program_id(0)
    j = pl.program_id(1)

    @pl.when(j == 0)
    def _init():
        m_sc[...] = jnp.full_like(m_sc, _NEG_BIG)
        l_sc[...] = jnp.zeros_like(l_sc)

    def _compute():
        c = c_ref[...].astype(cdt)
        kc = jnp.dot(c, wk_ref[...], preferred_element_type=jnp.float32) + bk_ref[...]
        kc_b = kc.astype(cdt)
        kc32 = kc_b.astype(jnp.float32)
        # -||kq - kc||^2 via quadratic expansion, all terms from the SAME
        # bf16-rounded kq/kc (f32 accumulation) -> no mixed-precision cancellation.
        sq = kc32 * kc32
        ones_row = jnp.ones((1, sq.shape[1]), jnp.float32)
        nc = jax.lax.dot_general(ones_row, sq, (((1,), (1,)), ((), ())),
                                 preferred_element_type=jnp.float32)       # [1, TILE]
        cross = jax.lax.dot_general(kq_ref[...], kc_b, (((1,), (1,)), ((), ())),
                                    preferred_element_type=jnp.float32)    # [B, TILE]
        sim = -(nq_ref[...] + nc - 2.0 * cross) * scale
        _softmax_tile_update(sim, p, j, n_valid, tile, tpp, needs_mask, sim_dtype,
                             sim_ref, m_sc, l_sc)

    if has_dummy:
        pl.when(p * tpp + j < n_tiles)(_compute)
    else:
        _compute()

    @pl.when(j == pl.num_programs(1) - 1)
    def _finalize():
        m_ref[0] = m_sc[...]
        l_ref[0] = l_sc[...]


# ------------------------------ Module wrapper -------------------------------

class DeepRetrievalModulePallas:
    def __init__(self, retrieval_type, in_dim, out_dim, k, normalization_sim,
                 deterministic_selection=(), n_features=None, key=None,
                 compute_dtype=jnp.bfloat16, sim_dtype=jnp.bfloat16,
                 num_parts=2, vmem_limit_bytes=None):
        assert retrieval_type in DEEP_RETRIEVAL_TYPES, \
            'Chosen retrieval type does not exist.'
        self.retrieval_type = retrieval_type
        self.k = k
        self.in_dim = in_dim
        self.out_dim = out_dim
        self.normalization_sim = normalization_sim
        self.deterministic_selection = list(deterministic_selection)
        self.num_features = n_features
        self.compute_dtype = compute_dtype
        self.sim_dtype = sim_dtype
        self.num_parts = max(1, int(num_parts))     # 2 -> uses both v7x TCs
        self.vmem_limit = (int(vmem_limit_bytes) if vmem_limit_bytes
                           else _default_vmem_limit())
        self._jitted = {}

        key = jax.random.PRNGKey(0) if key is None else key
        ks = jax.random.split(key, 10)

        def linear(kw, kb, fan_in, fan_out, bias=True):
            bound = 1.0 / float(np.sqrt(fan_in))
            w = jax.random.uniform(kw, (fan_out, fan_in), jnp.float32, -bound, bound)
            b = (jax.random.uniform(kb, (fan_out,), jnp.float32, -bound, bound)
                 if bias else None)
            return w, b

        Wk, bk = linear(ks[0], ks[1], in_dim, out_dim)
        Wq, bq = linear(ks[2], ks[3], in_dim, out_dim)
        Wv, bv = linear(ks[4], ks[5], in_dim, out_dim)
        Win, bin_ = linear(ks[6], ks[7], out_dim, out_dim)
        Wnb, _ = linear(ks[8], ks[9], out_dim, out_dim, bias=False)

        # f32 transposed copies for the tiny top-k epilogues (plain XLA).
        self.Wk_t, self.Wq_t, self.Wv_t = Wk.T, Wq.T, Wv.T
        self.Win_t, self.Wnb_t = Win.T, Wnb.T
        self.bk, self.bq, self.bv, self.bin = bk, bq, bv, bin_
        # bf16 weights + (1, out) f32 bias rows for the Pallas stats kernel.
        cdt = compute_dtype
        self.Wk_b = self.Wk_t.astype(cdt)
        self.Wq_b = self.Wq_t.astype(cdt)
        self.bk_row = bk.reshape(1, -1)
        self.bq_row = bq.reshape(1, -1)

    # -- tile / VMEM planning ---------------------------------------------

    def _choose_tile(self, B, in_dim):
        sim_bytes = jnp.dtype(self.sim_dtype).itemsize
        budget = int(self.vmem_limit * 0.6)          # headroom for weights/compiler
        per_row = (2 * in_dim * 4                    # double-buffered f32 candidate tile
                   + 2 * B * sim_bytes               # double-buffered sim output block
                   + self.out_dim * 6                # kc f32 + kc bf16 intermediates
                   + in_dim * 2)                     # bf16 cast of the candidate tile
        cap = budget // max(per_row, 1)
        target = max(1024, (2 * 1024 * 1024) // (in_dim * 4))   # >= ~2 MiB / step
        tile = max(256, min(cap, target, 8192))
        return (tile // 128) * 128

    # -- similarity + online-softmax statistics (the heavy Pallas pass) ----

    def _similarity_stats(self, kernel_fn, scale, q_side, c, weights):
        B = q_side[0].shape[0]
        N, in_dim = c.shape
        tile = min(self._choose_tile(B, in_dim), N)
        n_tiles = -(-N // tile)
        P = max(1, min(self.num_parts, n_tiles))     # leading "parallel" axis
        tpp = -(-n_tiles // P)                       # tiles per part
        n_out = P * tpp * tile
        needs_mask = (n_tiles * tile != N)           # partial edge tile only
        has_dummy = (P * tpp != n_tiles)             # grid-rounding tiles to skip

        kern = functools.partial(kernel_fn, self.compute_dtype, scale, N, tile,
                                 tpp, n_tiles, has_dummy, needs_mask, self.sim_dtype)

        c_spec = pl.BlockSpec(
            (tile, in_dim),
            lambda p, j: (jnp.minimum(p * tpp + j, n_tiles - 1), 0))
        in_specs = ([_full_spec(x.shape) for x in q_side] + [c_spec]
                    + [_full_spec(w.shape) for w in weights])
        out_specs = (pl.BlockSpec((B, tile), lambda p, j: (0, p * tpp + j)),
                     pl.BlockSpec((1, B, 1), lambda p, j: (p, 0, 0)),
                     pl.BlockSpec((1, B, 1), lambda p, j: (p, 0, 0)))
        out_shape = (jax.ShapeDtypeStruct((B, n_out), self.sim_dtype),
                     jax.ShapeDtypeStruct((P, B, 1), jnp.float32),
                     jax.ShapeDtypeStruct((P, B, 1), jnp.float32))

        sim, m_p, l_p = pl.pallas_call(
            kern,
            grid=(P, tpp),
            in_specs=in_specs,
            out_specs=out_specs,
            out_shape=out_shape,
            scratch_shapes=[pltpu.VMEM((B, 1), jnp.float32),
                            pltpu.VMEM((B, 1), jnp.float32)],
            compiler_params=pltpu.CompilerParams(
                dimension_semantics=("parallel", "arbitrary"),
                vmem_limit_bytes=self.vmem_limit),
        )(*q_side, c, *weights)

        # Merge per-part softmax statistics (P-way logsumexp; tiny).
        m = jnp.max(m_p, axis=0)                                   # [B, 1]
        l = jnp.sum(jnp.exp(m_p - m) * l_p, axis=0)                # [B, 1]
        return sim, m, l

    # -- selection + tiny epilogues (plain XLA under jit) -------------------

    def _topk_softmax(self, sim, m, l, n):
        kk = self.k if self.k != -1 else n
        top_sim, top_idx = jax.lax.top_k(sim[:, :n].astype(jnp.float32), kk)
        top_vals = jnp.exp(top_sim - m) / l      # exact softmax of the selected k
        return top_vals, top_idx

    def _value_projection_topk(self, c, top_idx):
        g = c[top_idx]                                             # [B, k, in]
        return jnp.einsum('bki,io->bko', g, self.Wv_t,
                          precision=jax.lax.Precision.HIGHEST) + self.bv

    def _bval_topk(self, q, c, top_idx):
        # T(K(c_topk) - K(q)) evaluated only for the B*k selected pairs.
        kq = jnp.dot(q, self.Wk_t,
                     precision=jax.lax.Precision.HIGHEST) + self.bk
        kc = jnp.einsum('bki,io->bko', c[top_idx], self.Wk_t,
                        precision=jax.lax.Precision.HIGHEST) + self.bk
        diff = kc - kq[:, None, :]
        h = jnp.einsum('bko,op->bkp', diff, self.Win_t,
                       precision=jax.lax.Precision.HIGHEST) + self.bin
        h = jnp.maximum(h, 0.0)
        # TODO(synk): nn.Dropout(p=0.1) is identity here (eval mode); training-mode
        # dropout masking is not implemented.
        return jnp.einsum('bkp,po->bko', h, self.Wnb_t,
                          precision=jax.lax.Precision.HIGHEST)

    def _reshape_out(self, out):
        B, kk, d = out.shape
        return out.reshape(B, kk, self.num_features, d // self.num_features)

    # -- forwards ---------------------------------------------------------

    def __call__(self, query_sample, candidate_samples):
        fn = self._jitted.get(self.retrieval_type)
        if fn is None:
            fn = jax.jit({
                'v-attention': self.forward_attention,
                'attention_bsim': self.forward_attention_bsim,
                'attention_bsim_bval': self.forward_attention_bsim_bval,
                'attention_bsim_nval': self.forward_attention_bsim_nval,
            }[self.retrieval_type])
            self._jitted[self.retrieval_type] = fn
        return fn(query_sample, candidate_samples)

    def _hoisted_q_proj(self, q):
        # Q(q) computed once (was recomputed per candidate tile in v2).
        q_b = q.astype(self.compute_dtype)
        qp = jnp.dot(q_b, self.Wq_b, preferred_element_type=jnp.float32) + self.bq_row
        return qp.astype(self.compute_dtype)

    def _hoisted_kq(self, q):
        # K(q) and ||K(q)||^2 computed once, in the same bf16 precision the
        # kernel uses for K(c) (consistent quadratic expansion).
        q_b = q.astype(self.compute_dtype)
        kq = jnp.dot(q_b, self.Wk_b, preferred_element_type=jnp.float32) + self.bk_row
        kq_b = kq.astype(self.compute_dtype)
        nq = jnp.sum(jnp.square(kq_b.astype(jnp.float32)), axis=1, keepdims=True)
        return kq_b, nq

    def forward_attention(self, q, c):
        N = c.shape[0]
        # reference does `similarity /= rsqrt(out_dim)`  ==  multiply by sqrt(out_dim)
        scale = float(np.sqrt(self.out_dim)) if self.normalization_sim else 1.0
        qp = self._hoisted_q_proj(q)
        sim, m, l = self._similarity_stats(
            _vattn_stats_kernel, scale, [qp], c, [self.Wk_b, self.bk_row])
        top_vals, top_idx = self._topk_softmax(sim, m, l, N)
        out = self._value_projection_topk(c, top_idx)    # V(.) only on top-k rows
        return self._reshape_out(out), top_vals

    def forward_attention_bsim(self, q, c):
        N = c.shape[0]
        scale = float(np.sqrt(self.out_dim)) if self.normalization_sim else 1.0
        kq_b, nq = self._hoisted_kq(q)
        sim, m, l = self._similarity_stats(
            _bsim_stats_kernel, scale, [kq_b, nq], c, [self.Wk_b, self.bk_row])
        top_vals, top_idx = self._topk_softmax(sim, m, l, N)
        out = self._value_projection_topk(c, top_idx)
        return self._reshape_out(out), top_vals

    def forward_attention_bsim_nval(self, q, c):
        N = c.shape[0]
        scale = float(np.sqrt(self.out_dim)) if self.normalization_sim else 1.0
        kq_b, nq = self._hoisted_kq(q)
        sim, m, l = self._similarity_stats(
            _bsim_stats_kernel, scale, [kq_b, nq], c, [self.Wk_b, self.bk_row])
        top_vals, top_idx = self._topk_softmax(sim, m, l, N)
        out = c[top_idx]          # aggregate the original encoded representation
        return self._reshape_out(out), top_vals

    def forward_attention_bsim_bval(self, q, c):
        N = c.shape[0]
        # reference does `similarity *= rsqrt(out_dim)`  ==  divide by sqrt(out_dim)
        scale = float(1.0 / np.sqrt(self.out_dim)) if self.normalization_sim else 1.0
        kq_b, nq = self._hoisted_kq(q)
        sim, m, l = self._similarity_stats(
            _bsim_stats_kernel, scale, [kq_b, nq], c, [self.Wk_b, self.bk_row])
        top_vals, top_idx = self._topk_softmax(sim, m, l, N)
        out = self._bval_topk(q, c, top_idx)
        return self._reshape_out(out), top_vals


# ---------------------------------- main -------------------------------------

if __name__ == "__main__":
    B, N = 2, 8            # batch of queries, number of candidates
    IN_DIM, OUT_DIM = 32, 32
    K, N_FEATURES = 3, 4

    key = jax.random.PRNGKey(0)
    key_q, key_c, key_p = jax.random.split(key, 3)
    query = jax.random.normal(key_q, (B, IN_DIM), jnp.float32)
    candidates = jax.random.normal(key_c, (N, IN_DIM), jnp.float32)

    # Small-N single-block path, all four retrieval types.
    for rtype in DEEP_RETRIEVAL_TYPES:
        module = DeepRetrievalModulePallas(
            retrieval_type=rtype, in_dim=IN_DIM, out_dim=OUT_DIM, k=K,
            normalization_sim=True, n_features=N_FEATURES, key=key_p)
        out, vals = module(query, candidates)
        out = jax.block_until_ready(out)
        vals = jax.block_until_ready(vals)

        last = (IN_DIM if rtype == 'attention_bsim_nval' else OUT_DIM) // N_FEATURES
        assert out.shape == (B, K, N_FEATURES, last), (rtype, out.shape)
        assert vals.shape == (B, K), (rtype, vals.shape)
        assert bool(jnp.all(jnp.isfinite(out))), rtype
        assert bool(jnp.all(jnp.isfinite(vals))), rtype
        assert bool(jnp.all((vals >= 0.0) & (vals <= 1.0 + 1e-5))), rtype
        assert bool(jnp.all(vals[:, :-1] + 1e-6 >= vals[:, 1:])), rtype

    # Large-N case: exercises the tiled / 2-part / partial-edge-tile / dummy-tile
    # path and validates the online softmax end-to-end (k=-1 -> probs sum to 1).
    N_BIG = 17000
    cand_big = jax.random.normal(key_c, (N_BIG, IN_DIM), jnp.float32)
    module = DeepRetrievalModulePallas(
        retrieval_type='attention_bsim', in_dim=IN_DIM, out_dim=OUT_DIM, k=-1,
        normalization_sim=True, n_features=N_FEATURES, key=key_p)
    out, vals = module(query, cand_big)
    out = jax.block_until_ready(out)
    vals = jax.block_until_ready(vals)
    assert out.shape == (B, N_BIG, N_FEATURES, OUT_DIM // N_FEATURES), out.shape
    assert vals.shape == (B, N_BIG), vals.shape
    assert bool(jnp.all(jnp.isfinite(vals)))
    assert bool(jnp.all((vals >= 0.0) & (vals <= 1.0 + 1e-5)))
    sums = jnp.sum(vals, axis=1)
    assert bool(jnp.all(jnp.abs(sums - 1.0) < 1e-3)), np.asarray(sums)

    print("KERNEL_OK")
</pallas_src>

<mosaic_0001>
module attributes {stable_mosaic.version = 11 : i64} {
  func.func @_vattn_stats_kernel(%arg0: i32, %arg1: i32, %arg2: memref<2x32xbf16, #tpu.memory_space<vmem>>, %arg3: memref<8x32xf32, #tpu.memory_space<vmem>>, %arg4: memref<32x32xbf16, #tpu.memory_space<vmem>>, %arg5: memref<1x32xf32, #tpu.memory_space<vmem>>, %arg6: memref<2x8xbf16, #tpu.memory_space<vmem>>, %arg7: memref<1x2x1xf32, #tpu.memory_space<vmem>>, %arg8: memref<1x2x1xf32, #tpu.memory_space<vmem>>, %arg9: memref<2x1xf32, #tpu.memory_space<vmem>>, %arg10: memref<2x1xf32, #tpu.memory_space<vmem>>) attributes {dimension_semantics = [#tpu.dimension_semantics<parallel>, #tpu.dimension_semantics<arbitrary>], iteration_bounds = array<i64: 1, 1>, scalar_prefetch = 0 : i64, scratch_operands = 2 : i64, tpu.core_type = #tpu.core_type<tc>, window_params = [{pipeline_mode = #tpu.pipeline_mode<synchronous>, transform_indices = @transform_0, window_bounds = array<i64: 2, 32>}, {transform_indices = @transform_1, window_bounds = array<i64: 8, 32>}, {pipeline_mode = #tpu.pipeline_mode<synchronous>, transform_indices = @transform_2, window_bounds = array<i64: 32, 32>}, {pipeline_mode = #tpu.pipeline_mode<synchronous>, transform_indices = @transform_3, window_bounds = array<i64: 1, 32>}, {transform_indices = @transform_4, window_bounds = array<i64: 2, 8>}, {transform_indices = @transform_5, window_bounds = array<i64: 1, 2, 1>}, {transform_indices = @transform_6, window_bounds = array<i64: 1, 2, 1>}]} {
    %c0_i32 = arith.constant 0 : i32
    %0 = arith.cmpi eq, %arg1, %c0_i32 : i32
    %1 = arith.extui %0 : i1 to i32
    %c0_i32_0 = arith.constant 0 : i32
    %2 = arith.cmpi ne, %1, %c0_i32_0 : i32
    scf.if %2 {
      %cst_24 = arith.constant -1.000000e+30 : f32
      %38 = vector.broadcast %cst_24 : f32 to vector<2x1xf32>
      %c0_25 = arith.constant 0 : index
      %c0_26 = arith.constant 0 : index
      %39 = vector.load %arg9[%c0_25, %c0_26] : memref<2x1xf32, #tpu.memory_space<vmem>>, vector<2x1xf32>
      tpu.vector_store %arg9[%c0_25, %c0_26], %38 {strides = array<i32>} : memref<2x1xf32, #tpu.memory_space<vmem>>, vector<2x1xf32>,
      %cst_27 = arith.constant 0.000000e+00 : f32
      %40 = vector.broadcast %cst_27 : f32 to vector<2x1xf32>
      %c0_28 = arith.constant 0 : index
      %c0_29 = arith.constant 0 : index
      %41 = vector.load %arg10[%c0_28, %c0_29] : memref<2x1xf32, #tpu.memory_space<vmem>>, vector<2x1xf32>
      tpu.vector_store %arg10[%c0_28, %c0_29], %40 {strides = array<i32>} : memref<2x1xf32, #tpu.memory_space<vmem>>, vector<2x1xf32>,
    } else {
    }
    %c0 = arith.constant 0 : index
    %c0_1 = arith.constant 0 : index
    %3 = vector.load %arg3[%c0, %c0_1] : memref<8x32xf32, #tpu.memory_space<vmem>>, vector<8x32xf32>
    %4 = arith.truncf %3 : vector<8x32xf32> to vector<8x32xbf16>
    %c0_2 = arith.constant 0 : index
    %c0_3 = arith.constant 0 : index
    %5 = vector.load %arg4[%c0_2, %c0_3] : memref<32x32xbf16, #tpu.memory_space<vmem>>, vector<32x32xbf16>
    %cst = arith.constant dense<0.000000e+00> : vector<8x32xf32>
    %6 = tpu.matmul %4, %5, %cst {dimension_numbers = #tpu.dot_dimension_numbers<[1], [0], [0], [1], [0, 0, 1, 1], [], []>} : vector<8x32xbf16>, vector<32x32xbf16>, vector<8x32xf32> -> vector<8x32xf32>
    %c0_4 = arith.constant 0 : index
    %c0_5 = arith.constant 0 : index
    %7 = vector.load %arg5[%c0_4, %c0_5] : memref<1x32xf32, #tpu.memory_space<vmem>>, vector<1x32xf32>
    %8 = vector.broadcast %7 : vector<1x32xf32> to vector<8x32xf32>
    %9 = arith.addf %6, %8 : vector<8x32xf32>
    %10 = arith.truncf %9 : vector<8x32xf32> to vector<8x32xbf16>
    %c0_6 = arith.constant 0 : index
    %c0_7 = arith.constant 0 : index
    %11 = vector.load %arg2[%c0_6, %c0_7] : memref<2x32xbf16, #tpu.memory_space<vmem>>, vector<2x32xbf16>
    %cst_8 = arith.constant dense<0.000000e+00> : vector<2x8xf32>
    %12 = tpu.matmul %11, %10, %cst_8 {dimension_numbers = #tpu.dot_dimension_numbers<[1], [1], [0], [0], [0, 0, 1, 0], [], []>} : vector<2x32xbf16>, vector<8x32xbf16>, vector<2x8xf32> -> vector<2x8xf32>
    %cst_9 = arith.constant 5.65685415 : f32
    %13 = vector.broadcast %cst_9 : f32 to vector<2x8xf32>
    %14 = arith.mulf %12, %13 : vector<2x8xf32>
    %15 = arith.truncf %14 : vector<2x8xf32> to vector<2x8xbf16>
    %16 = arith.extf %15 : vector<2x8xbf16> to vector<2x8xf32>
    %17 = arith.truncf %16 : vector<2x8xf32> to vector<2x8xbf16>
    %c0_10 = arith.constant 0 : index
    %c0_11 = arith.constant 0 : index
    %18 = vector.load %arg6[%c0_10, %c0_11] : memref<2x8xbf16, #tpu.memory_space<vmem>>, vector<2x8xbf16>
    tpu.vector_store %arg6[%c0_10, %c0_11], %17 {strides = array<i32>} : memref<2x8xbf16, #tpu.memory_space<vmem>>, vector<2x8xbf16>,
    %c0_12 = arith.constant 0 : index
    %c0_13 = arith.constant 0 : index
    %19 = vector.load %arg9[%c0_12, %c0_13] : memref<2x1xf32, #tpu.memory_space<vmem>>, vector<2x1xf32>
    %cst_14 = arith.constant dense<0xFF800000> : vector<2xf32>
    %20 = vector.multi_reduction <maximumf>, %16, %cst_14 [1] : vector<2x8xf32> to vector<2xf32>
    %21 = vector.shape_cast %20 : vector<2xf32> to vector<2x1xf32>
    %22 = arith.maximumf %19, %21 : vector<2x1xf32>
    %23 = arith.subf %19, %22 : vector<2x1xf32>
    %24 = math.exp %23 : vector<2x1xf32>
    %c0_15 = arith.constant 0 : index
    %c0_16 = arith.constant 0 : index
    %25 = vector.load %arg10[%c0_15, %c0_16] : memref<2x1xf32, #tpu.memory_space<vmem>>, vector<2x1xf32>
    %26 = arith.mulf %24, %25 : vector<2x1xf32>
    %27 = vector.broadcast %22 : vector<2x1xf32> to vector<2x8xf32>
    %28 = arith.subf %16, %27 : vector<2x8xf32>
    %29 = math.exp %28 : vector<2x8xf32>
    %cst_17 = arith.constant dense<0.000000e+00> : vector<2xf32>
    %30 = vector.multi_reduction <add>, %29, %cst_17 [1] : vector<2x8xf32> to vector<2xf32>
    %31 = vector.shape_cast %30 : vector<2xf32> to vector<2x1xf32>
    %32 = arith.addf %26, %31 : vector<2x1xf32>
    %c0_18 = arith.constant 0 : index
    %c0_19 = arith.constant 0 : index
    %33 = vector.load %arg10[%c0_18, %c0_19] : memref<2x1xf32, #tpu.memory_space<vmem>>, vector<2x1xf32>
    tpu.vector_store %arg10[%c0_18, %c0_19], %32 {strides = array<i32>} : memref<2x1xf32, #tpu.memory_space<vmem>>, vector<2x1xf32>,
    %c0_20 = arith.constant 0 : index
    %c0_21 = arith.constant 0 : index
    %34 = vector.load %arg9[%c0_20, %c0_21] : memref<2x1xf32, #tpu.memory_space<vmem>>, vector<2x1xf32>
    tpu.vector_store %arg9[%c0_20, %c0_21], %22 {strides = array<i32>} : memref<2x1xf32, #tpu.memory_space<vmem>>, vector<2x1xf32>,
    %c0_i32_22 = arith.constant 0 : i32
    %35 = arith.cmpi eq, %arg1, %c0_i32_22 : i32
    %36 = arith.extui %35 : i1 to i32
    %c0_i32_23 = arith.constant 0 : i32
    %37 = arith.cmpi ne, %36, %c0_i32_23 : i32
    scf.if %37 {
      %c0_24 = arith.constant 0 : index
      %c0_25 = arith.constant 0 : index
      %38 = vector.load %arg9[%c0_24, %c0_25] : memref<2x1xf32, #tpu.memory_space<vmem>>, vector<2x1xf32>
      %c0_26 = arith.constant 0 : index
      %c0_27 = arith.constant 0 : index
      %c0_28 = arith.constant 0 : index
      %39 = vector.load %arg7[%c0_26, %c0_27, %c0_28] : memref<1x2x1xf32, #tpu.memory_space<vmem>>, vector<1x2x1xf32>
      %40 = vector.shape_cast %39 : vector<1x2x1xf32> to vector<2x1xf32>
      %41 = vector.shape_cast %38 : vector<2x1xf32> to vector<1x2x1xf32>
      tpu.vector_store %arg7[%c0_26, %c0_27, %c0_28], %41 {strides = array<i32>} : memref<1x2x1xf32, #tpu.memory_space<vmem>>, vector<1x2x1xf32>,
      %c0_29 = arith.constant 0 : index
      %c0_30 = arith.constant 0 : index
      %42 = vector.load %arg10[%c0_29, %c0_30] : memref<2x1xf32, #tpu.memory_space<vmem>>, vector<2x1xf32>
      %c0_31 = arith.constant 0 : index
      %c0_32 = arith.constant 0 : index
      %c0_33 = arith.constant 0 : index
      %43 = vector.load %arg8[%c0_31, %c0_32, %c0_33] : memref<1x2x1xf32, #tpu.memory_space<vmem>>, vector<1x2x1xf32>
      %44 = vector.shape_cast %43 : vector<1x2x1xf32> to vector<2x1xf32>
      %45 = vector.shape_cast %42 : vector<2x1xf32> to vector<1x2x1xf32>
      tpu.vector_store %arg8[%c0_31, %c0_32, %c0_33], %45 {strides = array<i32>} : memref<1x2x1xf32, #tpu.memory_space<vmem>>, vector<1x2x1xf32>,
    } else {
    }
    return
  }
  func.func @transform_0(%arg0: i32, %arg1: i32) -> (i32, i32) {
    %c0_i32 = arith.constant 0 : i32
    %c0_i32_0 = arith.constant 0 : i32
    %c0_i32_1 = arith.constant 0 : i32
    return %c0_i32, %c0_i32_0 : i32, i32
  }
  func.func @transform_1(%arg0: i32, %arg1: i32) -> (i32, i32) {
    %c1_i32 = arith.constant 1 : i32
    %0 = arith.muli %arg0, %c1_i32 : i32
    %1 = arith.addi %0, %arg1 : i32
    %c0_i32 = arith.constant 0 : i32
    %2 = arith.minsi %1, %c0_i32 : i32
    %c0_i32_0 = arith.constant 0 : i32
    %c0_i32_1 = arith.constant 0 : i32
    return %2, %c0_i32_0 : i32, i32
  }
  func.func @transform_2(%arg0: i32, %arg1: i32) -> (i32, i32) {
    %c0_i32 = arith.constant 0 : i32
    %c0_i32_0 = arith.constant 0 : i32
    %c0_i32_1 = arith.constant 0 : i32
    return %c0_i32, %c0_i32_0 : i32, i32
  }
  func.func @transform_3(%arg0: i32, %arg1: i32) -> (i32, i32) {
    %c0_i32 = arith.constant 0 : i32
    %c0_i32_0 = arith.constant 0 : i32
    %c0_i32_1 = arith.constant 0 : i32
    return %c0_i32, %c0_i32_0 : i32, i32
  }
  func.func @transform_4(%arg0: i32, %arg1: i32) -> (i32, i32) {
    %c1_i32 = arith.constant 1 : i32
    %0 = arith.muli %arg0, %c1_i32 : i32
    %1 = arith.addi %0, %arg1 : i32
    %c0_i32 = arith.constant 0 : i32
    %c0_i32_0 = arith.constant 0 : i32
    return %c0_i32, %1 : i32, i32
  }
  func.func @transform_5(%arg0: i32, %arg1: i32) -> (i32, i32, i32) {
    %c0_i32 = arith.constant 0 : i32
    %c0_i32_0 = arith.constant 0 : i32
    %c0_i32_1 = arith.constant 0 : i32
    return %arg0, %c0_i32, %c0_i32_0 : i32, i32, i32
  }
  func.func @transform_6(%arg0: i32, %arg1: i32) -> (i32, i32, i32) {
    %c0_i32 = arith.constant 0 : i32
    %c0_i32_0 = arith.constant 0 : i32
    %c0_i32_1 = arith.constant 0 : i32
    return %arg0, %c0_i32, %c0_i32_0 : i32, i32, i32
  }
}

</mosaic_0001>

<llo_original>
// kernel: forward_attention.1
$region0: #{forward_attention.1}
  #allocation0 [shape = 'u32[]', space=smem, size = 0x4, offset = 0x4, fixed_abs, tag = 'smem constant byte address 0x4 - core index']
  #allocation1 [shape = 'u32[72,128]{1,0:T(1,128)}', space=vmem, size = 0x9000, scoped, tag = 'internal scratch']
  #allocation2 [shape = 'f32[2,1]{1,0:T(2,128)}', space=vmem, size = 0x400, scoped, tag = 'scratch operand']
  #allocation3 [shape = 'f32[2,1]{1,0:T(2,128)}', space=vmem, size = 0x400, scoped, tag = 'scratch operand']
  %s0 = inlined_call_operand.vmem [shape: bf16[2,32], index: 0, kind: input, shape index: {}]
  %s1 = inlined_call_operand.vmem [shape: f32[8,32], index: 1, kind: input, shape index: {}]
  %s2 = inlined_call_operand.hbm [shape: bf16[32,32], index: 2, kind: input, shape index: {}]
  %s3 = inlined_call_operand.vmem [shape: f32[1,32], index: 3, kind: input, shape index: {}]
  %s4 = inlined_call_operand.vmem [shape: bf16[2,8], index: 4, kind: output, shape index: {0}]
  %s5 = inlined_call_operand.vmem [shape: f32[1,2,1], index: 5, kind: output, shape index: {1}]
  %s6 = inlined_call_operand.vmem [shape: f32[1,2,1], index: 6, kind: output, shape index: {2}]
  %7 = xla_tuple %s4, %s5, %s6
  %s8 = sld [smem:[#allocation0]]
  $region54: #{forward_attention.1} parent=0
    _
  %s10 = ssub.s32 1, %s8
  %s11 = scalar_select 0, %s10, %s8
  $region1: #{forward_attention.1} parent=0
    #allocation4 [shape = 'u8[8192]{0}', space=vmem, size = 0x2000, scoped, tag = 'input window, operand 2, single buffered']
    #allocation5 [shape = 's32[1]{0}', space=sflag, size = 0x4, scoped, tag = 'scoped memory for forward_attention.1']
    %12 = vsyncpa [#allocation5], 0
    // Predicated region
    $region2: #{forward_attention.1} parent=1 // pred_check
      _
    $region3: #{forward_attention.1} parent=1 // pred_check_branch
      %14 = sbr.rel (0) target = $region5
    $region4: #{forward_attention.1} parent=1 // pred_region
      _
    $region5: #{forward_attention.1} parent=1 // pred_fallthru
      _
    // Predicated region
    $region6: #{forward_attention.1} parent=1 // pred_check
      _
    $region7: #{forward_attention.1} parent=1 // pred_check_branch
      %16 = sbr.rel (0) target = $region9
    $region8: #{forward_attention.1} parent=1 // pred_region
      %s17 = sadd.s32 0, 0
      %p18 = scmp.lt.s32.totalorder %s17, 0
      %s19 = scalar_select %p18, %s17, 0
      %p20 = scmp.lt.s32.totalorder %s19, 0
      %s21 = scalar_select %p20, %s19, 0
      %s22 = smul.addr %s21, 8
      %s23 = scalar_lea.vmem %s1, %s22
      %s24 = sadd.s32 0, 0
      %p25 = scmp.lt.s32.totalorder %s24, 0
      %s26 = scalar_select %p25, %s24, 0
    $region9: #{forward_attention.1} parent=1 // pred_fallthru
      _
    // Predicated region
    $region10: #{forward_attention.1} parent=1 // pred_check
      _
    $region11: #{forward_attention.1} parent=1 // pred_check_branch
      %28 = sbr.rel (0) target = $region13
    $region12: #{forward_attention.1} parent=1 // pred_region
      %30 = vsyncadd [#allocation5], 0
      %s31 = sshll.u32 %s2, 4
      %s32 = int_to_ptr.hbm [resolvable:$true] %s31
      %s33 = sshll.u32 [#allocation4], 4
      %s34 = int_to_ptr.vmem [resolvable:$true] %s33
      %39 = dma.hbm_to_vmem [thread:$0]  %s32, 256, %s34, [#allocation5], 64, 64, 4
    $region13: #{forward_attention.1} parent=1 // pred_fallthru
      _
    // Predicated region
    $region14: #{forward_attention.1} parent=1 // pred_check
      _
    $region15: #{forward_attention.1} parent=1 // pred_check_branch
      %41 = sbr.rel (0) target = $region17
    $region16: #{forward_attention.1} parent=1 // pred_region
      _
    $region17: #{forward_attention.1} parent=1 // pred_fallthru
      _
    // Predicated region
    $region18: #{forward_attention.1} parent=1 // pred_check
      _
    $region19: #{forward_attention.1} parent=1 // pred_check_branch
      %43 = sbr.rel (0) target = $region21
    $region20: #{forward_attention.1} parent=1 // pred_region
      %45 = dma.done [#allocation5], 256
    $region21: #{forward_attention.1} parent=1 // pred_fallthru
      _
    %s46 = sadd.s32 0, 0
    %p47 = scmp.lt.s32.totalorder %s46, 0
    %s48 = scalar_select %p47, %s46, 0
    %p49 = scmp.lt.s32.totalorder %s48, 0
    %s50 = scalar_select %p49, %s48, 0
    %s51 = smul.addr %s50, 8
    %s52 = scalar_lea.vmem %s1, %s51
    %s53 = sadd.s32 0, 0
    %p54 = scmp.lt.s32.totalorder %s53, 0
    %s55 = scalar_select %p54, %s53, 0
    %s56 = scalar_lea.vmem %s4, %s55
    %s57 = sadd.s32 0, 0
    %p58 = scmp.lt.s32.totalorder %s57, 0
    %s59 = scalar_select %p58, %s57, 0
    %p60 = scmp.lt.s32.totalorder %s59, 0
    %s61 = scalar_select %p60, %s59, 0
    %s62 = smul.addr %s61, 8
    %s63 = scalar_lea.vmem %s1, %s62
    %s64 = sadd.s32 0, 0
    %p65 = scmp.lt.s32.totalorder %s64, 0
    %s66 = scalar_select %p65, %s64, 0
    %s67 = sadd.s32 0, 0
    %p68 = scmp.lt.s32.totalorder %s67, 0
    %s69 = scalar_select %p68, %s67, 0
    %s70 = scalar_lea.vmem %s4, %s69
    %s71 = sadd.s32 0, 0
    %p73 = scmp.eq.s32.totalorder 0, 0
    // Predicated region
    $region22: #{forward_attention.1} parent=1 // pred_check
      %p74 = pneg %p73
    $region23: #{forward_attention.1} parent=1 // pred_check_branch
      %76 = sbr.rel (%p74) target = $region25
    $region24: #{forward_attention.1} parent=1 // pred_region
      %vm77 = vcmask 1024
      %78 = vst.msk [vmem:[#allocation2] sm:$0x3] %vm77, -1e+30
      %79 = vst.msk [vmem:[#allocation3] sm:$0x3] %vm77, 0.0
    $region25: #{forward_attention.1} parent=1 // pred_fallthru
      _
    %v80 = vld [vmem:[%s63] sm:$0xff]
    %v81 = vpack.c.bf16 %v80, %v80
    %v82 = vld [vmem:[#allocation4] sm:$0xf]
    %v83 = vld [vmem:[#allocation4 + $0x4] sm:$0xf]
    %v84 = vld [vmem:[#allocation4 + $0x8] sm:$0xf]
    %v85 = vld [vmem:[#allocation4 + $0xc] sm:$0xf]
    %v86 = vld [vmem:[%s3] sm:$0x1]
    %v88 = vperm.slane %v86, 0
    %v94 = vunpack.c.l.b16 %v82
    %v95 = vunpack.c.l.b16 %v83
    %v96 = vunpack.c.l.b16 %v84
    %v97 = vunpack.c.l.b16 %v85
    %v98 = vpack.c.b16 %v95, %v94
    %v99 = vpack.c.b16 %v97, %v96
    %vm102 = vcmask 261120
    %v104 = vsel %vm102, %v81, 0
    %106 = vmatpush.bf16.msra.mxu0 0
    %107 = vmatpush.bf16.msra.mxu0 0
    %108 = vmatpush.bf16.msra.mxu0 0
    %109 = vmatpush.bf16.msra.mxu0 0
    %110 = vmatpush.bf16.msra.mxu0 0
    %111 = vmatpush.bf16.msra.mxu0 0
    %112 = vmatpush.bf16.msra.mxu0 %v99
    %113 = vmatpush.bf16.msra.mxu0 %v98
    %114 = vmatmul.bf16.gmra.mxu0 %v104
    %v115 = vpop.f32.mrf.mxu0
    %v116 = vadd.f32 %v88, %v115
    %v117 = vpop.f32.mrf.mxu0
    %118 = vdwg.mxu0
    %v119 = vpack.c.bf16 %v116, %v116
    %v120 = vld [vmem:[%s0] sm:$0x1]
    %v122 = vsel %vm102, %v120, 0
    %v125 = vsel %vm102, %v119, 0
    %127 = vmatpush.bf16.xpose.msra.mxu0 0
    %128 = vmatpush.bf16.xpose.msra.mxu0 0
    %129 = vmatpush.bf16.xpose.msra.mxu0 0
    %130 = vmatpush.bf16.xpose.msra.mxu0 0
    %131 = vmatpush.bf16.xpose.msra.mxu0 0
    %132 = vmatpush.bf16.xpose.msra.mxu0 0
    %133 = vmatpush.bf16.xpose.msra.mxu0 0
    %134 = vmatpush.bf16.xpose.msra.mxu0 %v125
    %135 = vmatmul.bf16.gmra.mxu0 %v122
    %v136 = vpop.f32.mrf.mxu0
    %v137 = vadd.f32 0.0, %v136
    %v138 = vpop.f32.mrf.mxu0
    %139 = vdwg.mxu0
    %v140 = vmul.f32 %v137, 5.656854
    %v141 = vpack.c.bf16 %v140, %v140
    %v142 = vunpack.c.l.bf16 %v141
    %vm143 = vcmask 57344
    %144 = vst.msk [vmem:[%s70] sm:$0x1] %vm143, %v141
    %v145 = vld [vmem:[#allocation2] sm:$0x3]
    %vm146 = vcmask 58368
    %v147 = vsel %vm146, %v142, -inf
    %148 = vmax.xlane.f32.xlu0 %v147
    %v149 = vpop.xlane.xlu0 %148
    %v150 = vmax.f32 %v145, %v149
    %v151 = vsub.f32 %v145, %v150
    %v152 = vmul.f32 %v151, 1.442695
    %v153 = vpow.pop %v152
    %v154 = vld [vmem:[#allocation3] sm:$0x3]
    %v155 = vmul.f32 %v153, %v154
    %157 = vset.pattern.permute.xlu0 0
    %158 = vperm.xlu0 %157, %v150
    %v159 = vpop.permute.xlu0 %158
    %v161 = vsub.f32 %v142, %v159
    %v162 = vmul.f32 %v161, 1.442695
    %v163 = vpow.pop %v162
    %v164 = vsel %vm146, %v163, 0.0
    %165 = vadd.xlane.f32.xlu0 %v164
    %v166 = vpop.xlane.xlu0 %165
    %v167 = vadd.f32 %v155, %v166
    %vm168 = vcmask 1024
    %169 = vst.msk [vmem:[#allocation3] sm:$0x3] %vm168, %v167
    %170 = vst.msk [vmem:[#allocation2] sm:$0x3] %vm168, %v150
    // Predicated region
    $region26: #{forward_attention.1} parent=1 // pred_check
      %p171 = pneg %p73
    $region27: #{forward_attention.1} parent=1 // pred_check_branch
      %173 = sbr.rel (%p171) target = $region29
    $region28: #{forward_attention.1} parent=1 // pred_region
      %v174 = vld [vmem:[#allocation2] sm:$0x3]
      %175 = vst.msk [vmem:[%s5] sm:$0x3] %vm168, %v174
      %v176 = vld [vmem:[#allocation3] sm:$0x3]
      %177 = vst.msk [vmem:[%s6] sm:$0x3] %vm168, %v176
    $region29: #{forward_attention.1} parent=1 // pred_fallthru
      _
    %s178 = sadd.s32 0, 0
    %p179 = scmp.lt.s32.totalorder %s178, 0
    %s180 = scalar_select %p179, %s178, 0
    %s181 = scalar_lea.vmem %s4, %s180
    // Predicated region
    $region30: #{forward_attention.1} parent=1 // pred_check
      _
    $region31: #{forward_attention.1} parent=1 // pred_check_branch
      %183 = sbr.rel (0) target = $region33
    $region32: #{forward_attention.1} parent=1 // pred_region
      %s184 = sadd.s32 0, 0
    $region33: #{forward_attention.1} parent=1 // pred_fallthru
      _
    // Predicated region
    $region34: #{forward_attention.1} parent=1 // pred_check
      _
    $region35: #{forward_attention.1} parent=1 // pred_check_branch
      %186 = sbr.rel (0) target = $region37
    $region36: #{forward_attention.1} parent=1 // pred_region
      _
    $region37: #{forward_attention.1} parent=1 // pred_fallthru
      _
    // Predicated region
    $region38: #{forward_attention.1} parent=1 // pred_check
      _
    $region39: #{forward_attention.1} parent=1 // pred_check_branch
      %188 = sbr.rel (0) target = $region41
    $region40: #{forward_attention.1} parent=1 // pred_region
      _
    $region41: #{forward_attention.1} parent=1 // pred_fallthru
      _
    // Predicated region
    $region42: #{forward_attention.1} parent=1 // pred_check
      _
    $region43: #{forward_attention.1} parent=1 // pred_check_branch
      %190 = sbr.rel (0) target = $region45
    $region44: #{forward_attention.1} parent=1 // pred_region
      %s191 = sadd.s32 0, 0
      %p192 = scmp.lt.s32.totalorder %s191, 0
      %s193 = scalar_select %p192, %s191, 0
      %s194 = scalar_lea.vmem %s4, %s193
    $region45: #{forward_attention.1} parent=1 // pred_fallthru
      _
    // Predicated region
    $region46: #{forward_attention.1} parent=1 // pred_check
      _
    $region47: #{forward_attention.1} parent=1 // pred_check_branch
      %196 = sbr.rel (0) target = $region49
    $region48: #{forward_attention.1} parent=1 // pred_region
      _
    $region49: #{forward_attention.1} parent=1 // pred_fallthru
      _
    // Predicated region
    $region50: #{forward_attention.1} parent=1 // pred_check
      _
    $region51: #{forward_attention.1} parent=1 // pred_check_branch
      %198 = sbr.rel (0) target = $region53
    $region52: #{forward_attention.1} parent=1 // pred_region
      _
    $region53: #{forward_attention.1} parent=1 // pred_fallthru
      _
    %199 = vsyncpa [#allocation5], 1

</llo_original>
